<compile_context>
chip_gen: v7x
topology: tpu7x:2x2x1
jax: 0.10.0
libtpu: 0.0.40
codegen_flags: <defaults>
</compile_context>

<pallas_src>
import jax
import jax.numpy as jnp
from jax.experimental import pallas as pl
from jax.experimental.pallas import tpu as pltpu

LANES = 128


def fused_y0_linear_relu_kernel(w2_ref, b3_ref, y0_ref, o_ref):
    # w2_ref: SMEM (D,) f32  = 2*weight
    # b3_ref: SMEM (1,) f32  = 3*bias
    # y0_ref: VMEM (D, rows_blk, 128)   feature-major, lane-dense
    # o_ref : VMEM (rows_blk, 128)
    d_feat = y0_ref.shape[0]
    acc = y0_ref[0] * w2_ref[0]
    for d in range(1, d_feat):                 # static unroll over 6 features (VPU)
        acc = acc + y0_ref[d] * w2_ref[d]
    o_ref[...] = jnp.maximum(acc + b3_ref[0], 0.0).astype(o_ref.dtype)


def model_forward(x, weight, bias, *, block_rows=512):
    """x: (B, C, H, D) with C even, D == 6. weight: (1, 6), bias: (1,)."""
    B, C, H, D = x.shape
    assert C % 2 == 0
    half = C // 2
    M = B * half * H

    # Folded scalar constants -> SMEM.
    w2 = (2.0 * weight.reshape(D)).astype(jnp.float32)
    b3 = (3.0 * bias.reshape(1)).astype(jnp.float32)

    # Lane-dense, feature-major relayout of y0 ONLY (y1 is never touched).
    y0 = x[:, :half]                                  # (B, half, H, D)
    y0_t = jnp.moveaxis(y0, -1, 0).reshape(D, M)      # (D, M): one fused XLA copy pass

    rows = pl.cdiv(M, LANES)
    rblk = block_rows if rows >= block_rows else ((rows + 7) // 8) * 8
    rows_p = ((rows + rblk - 1) // rblk) * rblk
    Mp = rows_p * LANES
    if Mp != M:
        y0_t = jnp.pad(y0_t, ((0, 0), (0, Mp - M)))
    y0_3d = y0_t.reshape(D, rows_p, LANES)

    out_2d = pl.pallas_call(
        fused_y0_linear_relu_kernel,
        out_shape=jax.ShapeDtypeStruct((rows_p, LANES), x.dtype),
        grid=(rows_p // rblk,),
        in_specs=[
            pl.BlockSpec(memory_space=pltpu.MemorySpace.SMEM),      # w2 (scalars)
            pl.BlockSpec(memory_space=pltpu.MemorySpace.SMEM),      # b3 (scalar)
            pl.BlockSpec((D, rblk, LANES), lambda i: (0, i, 0)),    # y0 tile
        ],
        out_specs=pl.BlockSpec((rblk, LANES), lambda i: (i, 0)),
        compiler_params=pltpu.CompilerParams(
            dimension_semantics=("parallel",),
            vmem_limit_bytes=32 * 1024 * 1024,
        ),
    )(w2, b3, y0_3d)

    out_flat = out_2d.reshape(Mp)
    if Mp != M:
        out_flat = out_flat[:M]
    return out_flat.reshape(B, half, H, 1)


def model_forward_ref(x, weight, bias):
    """Pure-JAX reference mirroring the PyTorch forward exactly."""
    C = x.shape[1]
    y0, y1 = x[:, : C // 2], x[:, C // 2:]
    y2 = y0 - y1
    z = jnp.concatenate([y0, y1, y2], axis=1)
    z = jnp.einsum("bchd,kd->bchk", z, weight) + bias
    n = z.shape[1] // 3
    w, xx, y = z[:, :n], z[:, n:2 * n], z[:, 2 * n:]
    return jax.nn.relu(w + xx + y)


if __name__ == "__main__":
    key = jax.random.PRNGKey(0)
    kx, kw, kb = jax.random.split(key, 3)

    # Small shapes consistent with the module: Linear(6,1) acts on last dim -> D=6.
    B, C, H, D = 2, 4, 8, 6
    x = jax.random.normal(kx, (B, C, H, D), dtype=jnp.float32)

    # torch.nn.Linear(6, 1)-style params: weight (1, 6), bias (1,)
    bound = 1.0 / (D ** 0.5)
    weight = jax.random.uniform(kw, (1, D), jnp.float32, -bound, bound)
    bias = jax.random.uniform(kb, (1,), jnp.float32, -bound, bound)

    out = jax.jit(model_forward)(x, weight, bias)
    out = jax.block_until_ready(out)

    ref = model_forward_ref(x, weight, bias)
    assert out.shape == (B, C // 2, H, 1)
    assert jnp.allclose(out, ref, atol=1e-5, rtol=1e-5)

    print("KERNEL_OK")
</pallas_src>

<mosaic_0001>
module attributes {stable_mosaic.version = 11 : i64} {
  func.func @fused_y0_linear_relu_kernel(%arg0: i32, %arg1: memref<6xf32, #tpu.memory_space<smem>>, %arg2: memref<1xf32, #tpu.memory_space<smem>>, %arg3: memref<6x8x128xf32, #tpu.memory_space<vmem>>, %arg4: memref<8x128xf32, #tpu.memory_space<vmem>>) attributes {dimension_semantics = [#tpu.dimension_semantics<parallel>], iteration_bounds = array<i64: 1>, scalar_prefetch = 0 : i64, scratch_operands = 0 : i64, tpu.core_type = #tpu.core_type<tc>, window_params = [{transform_indices = @transform_0, window_bounds = array<i64: 6>}, {transform_indices = @transform_1, window_bounds = array<i64: 1>}, {transform_indices = @transform_2, window_bounds = array<i64: 6, 8, 128>}, {transform_indices = @transform_3, window_bounds = array<i64: 8, 128>}]} {
    %c0 = arith.constant 0 : index
    %c0_0 = arith.constant 0 : index
    %c0_1 = arith.constant 0 : index
    %0 = vector.load %arg3[%c0, %c0_0, %c0_1] : memref<6x8x128xf32, #tpu.memory_space<vmem>>, vector<1x8x128xf32>
    %1 = vector.shape_cast %0 : vector<1x8x128xf32> to vector<8x128xf32>
    %c0_2 = arith.constant 0 : index
    %2 = memref.load %arg1[%c0_2] : memref<6xf32, #tpu.memory_space<smem>>
    %3 = vector.broadcast %2 : f32 to vector<8x128xf32>
    %4 = arith.mulf %1, %3 : vector<8x128xf32>
    %c1 = arith.constant 1 : index
    %c0_3 = arith.constant 0 : index
    %c0_4 = arith.constant 0 : index
    %5 = vector.load %arg3[%c1, %c0_3, %c0_4] : memref<6x8x128xf32, #tpu.memory_space<vmem>>, vector<1x8x128xf32>
    %6 = vector.shape_cast %5 : vector<1x8x128xf32> to vector<8x128xf32>
    %c1_5 = arith.constant 1 : index
    %7 = memref.load %arg1[%c1_5] : memref<6xf32, #tpu.memory_space<smem>>
    %8 = vector.broadcast %7 : f32 to vector<8x128xf32>
    %9 = arith.mulf %6, %8 : vector<8x128xf32>
    %10 = arith.addf %4, %9 : vector<8x128xf32>
    %c2 = arith.constant 2 : index
    %c0_6 = arith.constant 0 : index
    %c0_7 = arith.constant 0 : index
    %11 = vector.load %arg3[%c2, %c0_6, %c0_7] : memref<6x8x128xf32, #tpu.memory_space<vmem>>, vector<1x8x128xf32>
    %12 = vector.shape_cast %11 : vector<1x8x128xf32> to vector<8x128xf32>
    %c2_8 = arith.constant 2 : index
    %13 = memref.load %arg1[%c2_8] : memref<6xf32, #tpu.memory_space<smem>>
    %14 = vector.broadcast %13 : f32 to vector<8x128xf32>
    %15 = arith.mulf %12, %14 : vector<8x128xf32>
    %16 = arith.addf %10, %15 : vector<8x128xf32>
    %c3 = arith.constant 3 : index
    %c0_9 = arith.constant 0 : index
    %c0_10 = arith.constant 0 : index
    %17 = vector.load %arg3[%c3, %c0_9, %c0_10] : memref<6x8x128xf32, #tpu.memory_space<vmem>>, vector<1x8x128xf32>
    %18 = vector.shape_cast %17 : vector<1x8x128xf32> to vector<8x128xf32>
    %c3_11 = arith.constant 3 : index
    %19 = memref.load %arg1[%c3_11] : memref<6xf32, #tpu.memory_space<smem>>
    %20 = vector.broadcast %19 : f32 to vector<8x128xf32>
    %21 = arith.mulf %18, %20 : vector<8x128xf32>
    %22 = arith.addf %16, %21 : vector<8x128xf32>
    %c4 = arith.constant 4 : index
    %c0_12 = arith.constant 0 : index
    %c0_13 = arith.constant 0 : index
    %23 = vector.load %arg3[%c4, %c0_12, %c0_13] : memref<6x8x128xf32, #tpu.memory_space<vmem>>, vector<1x8x128xf32>
    %24 = vector.shape_cast %23 : vector<1x8x128xf32> to vector<8x128xf32>
    %c4_14 = arith.constant 4 : index
    %25 = memref.load %arg1[%c4_14] : memref<6xf32, #tpu.memory_space<smem>>
    %26 = vector.broadcast %25 : f32 to vector<8x128xf32>
    %27 = arith.mulf %24, %26 : vector<8x128xf32>
    %28 = arith.addf %22, %27 : vector<8x128xf32>
    %c5 = arith.constant 5 : index
    %c0_15 = arith.constant 0 : index
    %c0_16 = arith.constant 0 : index
    %29 = vector.load %arg3[%c5, %c0_15, %c0_16] : memref<6x8x128xf32, #tpu.memory_space<vmem>>, vector<1x8x128xf32>
    %30 = vector.shape_cast %29 : vector<1x8x128xf32> to vector<8x128xf32>
    %c5_17 = arith.constant 5 : index
    %31 = memref.load %arg1[%c5_17] : memref<6xf32, #tpu.memory_space<smem>>
    %32 = vector.broadcast %31 : f32 to vector<8x128xf32>
    %33 = arith.mulf %30, %32 : vector<8x128xf32>
    %34 = arith.addf %28, %33 : vector<8x128xf32>
    %c0_18 = arith.constant 0 : index
    %35 = memref.load %arg2[%c0_18] : memref<1xf32, #tpu.memory_space<smem>>
    %36 = vector.broadcast %35 : f32 to vector<8x128xf32>
    %37 = arith.addf %34, %36 : vector<8x128xf32>
    %cst = arith.constant 0.000000e+00 : f32
    %38 = vector.broadcast %cst : f32 to vector<8x128xf32>
    %39 = arith.maximumf %37, %38 : vector<8x128xf32>
    %c0_19 = arith.constant 0 : index
    %c0_20 = arith.constant 0 : index
    %40 = vector.load %arg4[%c0_19, %c0_20] : memref<8x128xf32, #tpu.memory_space<vmem>>, vector<8x128xf32>
    tpu.vector_store %arg4[%c0_19, %c0_20], %39 {strides = array<i32>} : memref<8x128xf32, #tpu.memory_space<vmem>>, vector<8x128xf32>,
    return
  }
  func.func @transform_0(%arg0: i32) -> i32 {
    %c0_i32 = arith.constant 0 : i32
    %c0_i32_0 = arith.constant 0 : i32
    return %c0_i32 : i32
  }
  func.func @transform_1(%arg0: i32) -> i32 {
    %c0_i32 = arith.constant 0 : i32
    %c0_i32_0 = arith.constant 0 : i32
    return %c0_i32 : i32
  }
  func.func @transform_2(%arg0: i32) -> (i32, i32, i32) {
    %c0_i32 = arith.constant 0 : i32
    %c0_i32_0 = arith.constant 0 : i32
    %c0_i32_1 = arith.constant 0 : i32
    return %c0_i32, %arg0, %c0_i32_0 : i32, i32, i32
  }
  func.func @transform_3(%arg0: i32) -> (i32, i32) {
    %c0_i32 = arith.constant 0 : i32
    %c0_i32_0 = arith.constant 0 : i32
    return %arg0, %c0_i32 : i32, i32
  }
}

</mosaic_0001>

<llo_original>
// kernel: model_forward.1
$region0: #{model_forward.1}
  #allocation0 [shape = 'u32[]', space=smem, size = 0x4, offset = 0x4, fixed_abs, tag = 'smem constant byte address 0x4 - core index']
  #allocation1 [shape = 'u32[144,128]{1,0:T(1,128)}', space=vmem, size = 0x12000, scoped, tag = 'internal scratch']
  #allocation2 [shape = 'f32[1]{0:T(128)S(6)}', space=smem, size = 0x200, scoped, tag = 'scoped memory for model_forward.1']
  %s0 = inlined_call_operand.vmem [shape: f32[6], index: 0, kind: input, shape index: {}]
  %s1 = inlined_call_operand.<no memory space> [shape: f32[1], index: 1, kind: input, shape index: {}]
  %s2 = inlined_call_operand.vmem [shape: f32[6,8,128], index: 2, kind: input, shape index: {}]
  %s3 = inlined_call_operand.vmem [shape: f32[8,128], index: 3, kind: output, shape index: {}]
  %s4 = sld [smem:[#allocation0]]
  $region26: #{model_forward.1} parent=0
    _
  %s6 = ssub.s32 1, %s4
  %s7 = scalar_select 0, %s6, %s4
  %8 = sst [smem:[#allocation2]] %s1
  $region1: #{model_forward.1} parent=0
    #allocation3 [shape = 'u8[512]{0}', space=smem, size = 0x200, scoped, tag = 'input window, operand 0, single buffered']
    #allocation4 [shape = 's32[1]{0}', space=sflag, size = 0x4, scoped, tag = 'scoped memory for model_forward.1']
    %9 = vsyncpa [#allocation4], 0
    // Predicated region
    $region2: #{model_forward.1} parent=1 // pred_check
      _
    $region3: #{model_forward.1} parent=1 // pred_check_branch
      %11 = sbr.rel (0) target = $region5
    $region4: #{model_forward.1} parent=1 // pred_region
      %s13 = ssub.s32 16, 16
      %14 = vsyncadd [#allocation4], %s13
      %s16 = sshll.u32 %s0, 4
      %s17 = int_to_ptr.vmem [resolvable:$true] %s16
      %19 = dma.vmem_to_smem %s17, 16, [#allocation3], [#allocation4]
    $region5: #{model_forward.1} parent=1 // pred_fallthru
      _
    // Predicated region
    $region6: #{model_forward.1} parent=1 // pred_check
      _
    $region7: #{model_forward.1} parent=1 // pred_check_branch
      %21 = sbr.rel (0) target = $region9
    $region8: #{model_forward.1} parent=1 // pred_region
      _
    $region9: #{model_forward.1} parent=1 // pred_fallthru
      _
    // Predicated region
    $region10: #{model_forward.1} parent=1 // pred_check
      _
    $region11: #{model_forward.1} parent=1 // pred_check_branch
      %23 = sbr.rel (0) target = $region13
    $region12: #{model_forward.1} parent=1 // pred_region
      _
    $region13: #{model_forward.1} parent=1 // pred_fallthru
      _
    // Predicated region
    $region14: #{model_forward.1} parent=1 // pred_check
      _
    $region15: #{model_forward.1} parent=1 // pred_check_branch
      %25 = sbr.rel (0) target = $region17
    $region16: #{model_forward.1} parent=1 // pred_region
      %26 = dma.done [#allocation4], 16
    $region17: #{model_forward.1} parent=1 // pred_fallthru
      _
    %27 = sfence
    %v28 = vld [vmem:[%s2] sm:$0xff]
    %s29 = sld [smem:[#allocation3]]
    %v30 = vstv %s29
    %v31 = vmul.f32 %v28, %v30
    %s32 = scalar_lea.vmem %s2, 8
    %v33 = vld [vmem:[%s32] sm:$0xff]
    %s34 = sld [smem:[#allocation3 + $0x1]]
    %v35 = vstv %s34
    %v36 = vmul.f32 %v33, %v35
    %v37 = vadd.f32 %v31, %v36
    %s38 = scalar_lea.vmem %s2, 16
    %v39 = vld [vmem:[%s38] sm:$0xff]
    %s40 = sld [smem:[#allocation3 + $0x2]]
    %v41 = vstv %s40
    %v42 = vmul.f32 %v39, %v41
    %v43 = vadd.f32 %v37, %v42
    %s44 = scalar_lea.vmem %s2, 24
    %v45 = vld [vmem:[%s44] sm:$0xff]
    %s46 = sld [smem:[#allocation3 + $0x3]]
    %v47 = vstv %s46
    %v48 = vmul.f32 %v45, %v47
    %v49 = vadd.f32 %v43, %v48
    %s50 = scalar_lea.vmem %s2, 32
    %v51 = vld [vmem:[%s50] sm:$0xff]
    %s52 = sld [smem:[#allocation3 + $0x4]]
    %v53 = vstv %s52
    %v54 = vmul.f32 %v51, %v53
    %v55 = vadd.f32 %v49, %v54
    %s56 = scalar_lea.vmem %s2, 40
    %v57 = vld [vmem:[%s56] sm:$0xff]
    %s58 = sld [smem:[#allocation3 + $0x5]]
    %v59 = vstv %s58
    %v60 = vmul.f32 %v57, %v59
    %v61 = vadd.f32 %v55, %v60
    %s62 = sld [smem:[#allocation2]]
    %v63 = vstv %s62
    %v64 = vadd.f32 %v61, %v63
    %v65 = vmax.f32 %v64, 0.0
    %66 = vst [vmem:[%s3] sm:$0xff] %v65
    // Predicated region
    $region18: #{model_forward.1} parent=1 // pred_check
      _
    $region19: #{model_forward.1} parent=1 // pred_check_branch
      %68 = sbr.rel (0) target = $region21
    $region20: #{model_forward.1} parent=1 // pred_region
      _
    $region21: #{model_forward.1} parent=1 // pred_fallthru
      _
    // Predicated region
    $region22: #{model_forward.1} parent=1 // pred_check
      _
    $region23: #{model_forward.1} parent=1 // pred_check_branch
      %70 = sbr.rel (0) target = $region25
    $region24: #{model_forward.1} parent=1 // pred_region
      _
    $region25: #{model_forward.1} parent=1 // pred_fallthru
      _
    %71 = vsyncpa [#allocation4], 1

</llo_original>
